<compile_context>
chip_gen: v5e
topology: v5e:2x2
jax: 0.10.0
libtpu: 0.0.40
codegen_flags: <defaults>
</compile_context>

<pallas_src>
import jax
import jax.numpy as jnp
from jax.experimental import pallas as pl
from jax.experimental.pallas import tpu as pltpu


def clinic_branch_kernel(clinic_ref, w_ref, b_ref, out_ref):
    # clinic_ref: (R, 1), w_ref/b_ref: (1, D) -> broadcast FMA on the VPU.
    out = clinic_ref[...] * w_ref[...] + b_ref[...]
    out_ref[...] = out.astype(out_ref.dtype)


def clinic_branch_forward(clinic, weight, bias):
    """
    clinic : (1, clinic_dim) f32
    weight : (dim, 1) f32   (PyTorch nn.Linear(1, dim).weight layout)
    bias   : (dim,)   f32
    returns: (1, clinic_dim, dim) f32
    """
    _, clinic_dim = clinic.shape
    dim = weight.shape[0]

    # ---- layout plumbing at the HBM boundary (metadata + DMA shape, no kernel cost) ----
    ROW_TILE = 512  # rows per grid step once clinic_dim is large (f32: 512*D_pad << VMEM)
    c_pad = max(8, ((clinic_dim + 7) // 8) * 8)          # sublane-aligned rows
    if c_pad <= ROW_TILE:
        row_tile = c_pad
    else:
        c_pad = ((c_pad + ROW_TILE - 1) // ROW_TILE) * ROW_TILE
        row_tile = ROW_TILE
    d_pad = max(128, ((dim + 127) // 128) * 128)          # lane-dense columns

    clinic_col = jnp.zeros((c_pad, 1), jnp.float32).at[:clinic_dim, 0].set(clinic[0, :])
    w_row = jnp.zeros((1, d_pad), jnp.float32).at[0, :dim].set(weight[:, 0])
    b_row = jnp.zeros((1, d_pad), jnp.float32).at[0, :dim].set(bias)

    grid = (c_pad // row_tile,)

    out = pl.pallas_call(
        clinic_branch_kernel,
        out_shape=jax.ShapeDtypeStruct((c_pad, d_pad), jnp.float32),
        grid=grid,
        in_specs=[
            pl.BlockSpec((row_tile, 1), lambda i: (i, 0),
                         memory_space=pltpu.MemorySpace.VMEM),
            pl.BlockSpec((1, d_pad), lambda i: (0, 0),
                         memory_space=pltpu.MemorySpace.VMEM),
            pl.BlockSpec((1, d_pad), lambda i: (0, 0),
                         memory_space=pltpu.MemorySpace.VMEM),
        ],
        out_specs=pl.BlockSpec((row_tile, d_pad), lambda i: (i, 0),
                               memory_space=pltpu.MemorySpace.VMEM),
        compiler_params=pltpu.CompilerParams(
            dimension_semantics=("parallel",)),
    )(clinic_col, w_row, b_row)

    # Strip padding, then unsqueeze(0) -> (1, clinic_dim, dim).
    return out[:clinic_dim, :dim][None, :, :]


if __name__ == "__main__":
    clinic_dim = 16
    dim = 64

    key = jax.random.PRNGKey(0)
    k_clinic, k_w, k_b = jax.random.split(key, 3)

    # Deterministic synthetic parameters (shapes from nn.Linear(1, dim)).
    clinic = jax.random.normal(k_clinic, (1, clinic_dim), dtype=jnp.float32)
    weight = jax.random.normal(k_w, (dim, 1), dtype=jnp.float32) * 0.1
    bias = jax.random.normal(k_b, (dim,), dtype=jnp.float32) * 0.01

    feat = clinic_branch_forward(clinic, weight, bias)
    feat = jax.block_until_ready(feat)

    # Reference check in plain JAX (same math as the PyTorch forward, eval mode).
    ref = (clinic.T @ weight.T + bias)[None, :, :]
    assert feat.shape == (1, clinic_dim, dim), feat.shape
    assert jnp.allclose(feat, ref, atol=1e-5, rtol=1e-5)

    print("KERNEL_OK")
</pallas_src>

<mosaic_0001>
module attributes {stable_mosaic.version = 11 : i64} {
  func.func @clinic_branch_kernel(%arg0: i32, %arg1: memref<16x1xf32, #tpu.memory_space<vmem>>, %arg2: memref<1x128xf32, #tpu.memory_space<vmem>>, %arg3: memref<1x128xf32, #tpu.memory_space<vmem>>, %arg4: memref<16x128xf32, #tpu.memory_space<vmem>>) attributes {dimension_semantics = [#tpu.dimension_semantics<parallel>], iteration_bounds = array<i64: 1>, scalar_prefetch = 0 : i64, scratch_operands = 0 : i64, tpu.core_type = #tpu.core_type<tc>, window_params = [{transform_indices = @transform_0, window_bounds = array<i64: 16, 1>}, {pipeline_mode = #tpu.pipeline_mode<synchronous>, transform_indices = @transform_1, window_bounds = array<i64: 1, 128>}, {pipeline_mode = #tpu.pipeline_mode<synchronous>, transform_indices = @transform_2, window_bounds = array<i64: 1, 128>}, {transform_indices = @transform_3, window_bounds = array<i64: 16, 128>}]} {
    %c0 = arith.constant 0 : index
    %c0_0 = arith.constant 0 : index
    %0 = vector.load %arg1[%c0, %c0_0] : memref<16x1xf32, #tpu.memory_space<vmem>>, vector<16x1xf32>
    %c0_1 = arith.constant 0 : index
    %c0_2 = arith.constant 0 : index
    %1 = vector.load %arg2[%c0_1, %c0_2] : memref<1x128xf32, #tpu.memory_space<vmem>>, vector<1x128xf32>
    %2 = vector.broadcast %0 : vector<16x1xf32> to vector<16x128xf32>
    %3 = vector.broadcast %1 : vector<1x128xf32> to vector<16x128xf32>
    %4 = arith.mulf %2, %3 : vector<16x128xf32>
    %c0_3 = arith.constant 0 : index
    %c0_4 = arith.constant 0 : index
    %5 = vector.load %arg3[%c0_3, %c0_4] : memref<1x128xf32, #tpu.memory_space<vmem>>, vector<1x128xf32>
    %6 = vector.broadcast %5 : vector<1x128xf32> to vector<16x128xf32>
    %7 = arith.addf %4, %6 : vector<16x128xf32>
    %c0_5 = arith.constant 0 : index
    %c0_6 = arith.constant 0 : index
    %8 = vector.load %arg4[%c0_5, %c0_6] : memref<16x128xf32, #tpu.memory_space<vmem>>, vector<16x128xf32>
    tpu.vector_store %arg4[%c0_5, %c0_6], %7 {strides = array<i32>} : memref<16x128xf32, #tpu.memory_space<vmem>>, vector<16x128xf32>,
    return
  }
  func.func @transform_0(%arg0: i32) -> (i32, i32) {
    %c0_i32 = arith.constant 0 : i32
    %c0_i32_0 = arith.constant 0 : i32
    return %arg0, %c0_i32 : i32, i32
  }
  func.func @transform_1(%arg0: i32) -> (i32, i32) {
    %c0_i32 = arith.constant 0 : i32
    %c0_i32_0 = arith.constant 0 : i32
    %c0_i32_1 = arith.constant 0 : i32
    return %c0_i32, %c0_i32_0 : i32, i32
  }
  func.func @transform_2(%arg0: i32) -> (i32, i32) {
    %c0_i32 = arith.constant 0 : i32
    %c0_i32_0 = arith.constant 0 : i32
    %c0_i32_1 = arith.constant 0 : i32
    return %c0_i32, %c0_i32_0 : i32, i32
  }
  func.func @transform_3(%arg0: i32) -> (i32, i32) {
    %c0_i32 = arith.constant 0 : i32
    %c0_i32_0 = arith.constant 0 : i32
    return %arg0, %c0_i32 : i32, i32
  }
}

</mosaic_0001>

<llo_original>
// kernel: tpu_custom_call.1
$region0: #{tpu_custom_call.1}
  #allocation0 [shape = 'u32[]', space=smem, size = 0x4, offset = 0x4, fixed_abs, tag = 'smem constant byte address 0x4 - core index']
  #allocation1 [shape = 'u32[72,128]{1,0:T(1,128)}', space=vmem, size = 0x9000, scoped, tag = 'internal scratch']
  %s0 = inlined_call_operand.vmem [shape: f32[16,1], index: 0, kind: input, shape index: {}]
  %s1 = inlined_call_operand.vmem [shape: f32[1,128], index: 1, kind: input, shape index: {}]
  %s2 = inlined_call_operand.vmem [shape: f32[1,128], index: 2, kind: input, shape index: {}]
  %s3 = inlined_call_operand.hbm [shape: f32[16,128], index: 3, kind: output, shape index: {}]
  %s4 = sld [smem:[#allocation0]]
  $region22: #{tpu_custom_call.1} parent=0
    _
  %s6 = ssub.s32 1, %s4
  %s7 = scalar_select 0, %s6, %s4
  $region1: #{tpu_custom_call.1} parent=0
    #allocation2 [shape = 'u8[8192]{0}', space=vmem, size = 0x2000, scoped, tag = 'output window, operand 0, single buffered']
    #allocation3 [shape = 's32[1]{0}', space=sflag, size = 0x4, scoped, tag = 'scoped memory for tpu_custom_call.1']
    %8 = vsyncpa [#allocation3], 0
    // Predicated region
    $region2: #{tpu_custom_call.1} parent=1 // pred_check
      _
    $region3: #{tpu_custom_call.1} parent=1 // pred_check_branch
      %10 = sbr.rel (0) target = $region5
    $region4: #{tpu_custom_call.1} parent=1 // pred_region
      _
    $region5: #{tpu_custom_call.1} parent=1 // pred_fallthru
      _
    // Predicated region
    $region6: #{tpu_custom_call.1} parent=1 // pred_check
      _
    $region7: #{tpu_custom_call.1} parent=1 // pred_check_branch
      %12 = sbr.rel (0) target = $region9
    $region8: #{tpu_custom_call.1} parent=1 // pred_region
      _
    $region9: #{tpu_custom_call.1} parent=1 // pred_fallthru
      _
    // Predicated region
    $region10: #{tpu_custom_call.1} parent=1 // pred_check
      _
    $region11: #{tpu_custom_call.1} parent=1 // pred_check_branch
      %14 = sbr.rel (0) target = $region13
    $region12: #{tpu_custom_call.1} parent=1 // pred_region
      _
    $region13: #{tpu_custom_call.1} parent=1 // pred_fallthru
      _
    %v15 = vld [vmem:[%s0] sm:$0xff]
    %v16 = vld [vmem:[%s0 + $0x8] sm:$0xff]
    %v17 = vld [vmem:[%s1] sm:$0x1]
    %19 = vset.pattern.permute.xlu0 0
    %20 = vperm.xlu0 %19, %v15
    %v21 = vpop.permute.xlu0 %20
    %24 = vset.pattern.permute.xlu0 0
    %25 = vperm.xlu0 %24, %v16
    %v26 = vpop.permute.xlu0 %25
    %v29 = vperm.slane %v17, 0
    %v31 = vmul.f32 %v21, %v29
    %v32 = vmul.f32 %v26, %v29
    %v33 = vld [vmem:[%s2] sm:$0x1]
    %v35 = vperm.slane %v33, 0
    %v37 = vadd.f32 %v31, %v35
    %v38 = vadd.f32 %v32, %v35
    %39 = vst [vmem:[#allocation2] sm:$0xff] %v37
    %40 = vst [vmem:[#allocation2 + $0x8] sm:$0xff] %v38
    // Predicated region
    $region14: #{tpu_custom_call.1} parent=1 // pred_check
      _
    $region15: #{tpu_custom_call.1} parent=1 // pred_check_branch
      %42 = sbr.rel (0) target = $region17
    $region16: #{tpu_custom_call.1} parent=1 // pred_region
      %44 = vsyncadd [#allocation3], 0
      %s45 = sshll.u32 [#allocation2], 4
      %s46 = int_to_ptr.vmem [resolvable:$true] %s45
      %s47 = sshll.u32 %s3, 4
      %s48 = int_to_ptr.hbm [resolvable:$true] %s47
      %53 = dma.vmem_to_hbm [thread:$0]  %s46, 256, %s48, [#allocation3], 128, 128, 8
    $region17: #{tpu_custom_call.1} parent=1 // pred_fallthru
      _
    // Predicated region
    $region18: #{tpu_custom_call.1} parent=1 // pred_check
      _
    $region19: #{tpu_custom_call.1} parent=1 // pred_check_branch
      %55 = sbr.rel (0) target = $region21
    $region20: #{tpu_custom_call.1} parent=1 // pred_region
      %57 = dma.done [#allocation3], 256
    $region21: #{tpu_custom_call.1} parent=1 // pred_fallthru
      _
    %58 = vsyncpa [#allocation3], 1

</llo_original>
